<compile_context>
chip_gen: v6e
topology: v6e:2x2x1
jax: 0.10.0
libtpu: 0.0.40
codegen_flags: <defaults>
</compile_context>

<pallas_src>
import functools
import numpy as np
import jax
import jax.numpy as jnp
from jax.experimental import pallas as pl
from jax.experimental.pallas import tpu as pltpu


def _round_up(v, m):
    return ((v + m - 1) // m) * m


def _fc_kernel(x_ref, w_ref, b_ref, o_ref, *, weight_gain, activation):
    # x_ref: (tm, K) input tile (possibly bf16)
    # w_ref: (K, Npad) pre-transposed weight (grid-invariant block)
    # b_ref: (1, Npad) f32 bias, bias_gain already folded in
    acc = jnp.dot(x_ref[...], w_ref[...], preferred_element_type=jnp.float32)
    # Scale the (tm, Npad) accumulator instead of the (K, Npad) weight:
    # per-step VALU work is tm*N, and the gain is applied in f32.
    acc = acc * jnp.float32(weight_gain)
    y = acc + b_ref[...]  # broadcast (1, Npad) over rows, all f32
    if activation == "linear":
        pass
    elif activation == "lrelu":
        y = jnp.where(y >= 0, y, 0.2 * y) * np.float32(np.sqrt(2.0))
    elif activation == "relu":
        y = jnp.maximum(y, 0.0) * np.float32(np.sqrt(2.0))
    else:
        # TODO(synk): other bias_act activations (sigmoid/tanh/swish/...) not wired.
        raise NotImplementedError(activation)
    o_ref[...] = y.astype(o_ref.dtype)


class FullyConnectedLayerBase:
    """JAX/Pallas port of eg3d FullyConnectedLayerBase (forward only)."""

    def __init__(self, in_features, out_features, activation="linear",
                 lr_multiplier: float = 1.0):
        self.in_features = in_features
        self.out_features = out_features
        self.activation = activation
        self.weight_gain = lr_multiplier / np.sqrt(in_features)
        self.bias_gain = lr_multiplier
        self.weight = None  # (out_features, in_features), PyTorch convention
        self.bias = None    # (out_features,)
        # Lane-dense padded output width (multiple of 128 -> unmasked stores).
        self._n_pad = _round_up(out_features, 128)
        self._wt = None     # (K, Npad) pre-transposed, zero-padded
        self._b2d = None    # (1, Npad) f32, bias_gain folded in

    def init_params(self, key):
        # Deterministic synthetic init (the base class leaves these None).
        kw, kb = jax.random.split(key)
        self.weight = jax.random.normal(
            kw, (self.out_features, self.in_features), dtype=jnp.float32)
        self.bias = jax.random.normal(
            kb, (self.out_features,), dtype=jnp.float32) * 0.1
        self._prepare()

    def _prepare(self):
        # Done ONCE: transpose weight to (K, Npad) so the kernel never
        # transposes/relayouts a grid-invariant operand, and pre-fold
        # bias_gain into an f32 bias row.
        N, K, Npad = self.out_features, self.in_features, self._n_pad
        wt = jnp.zeros((K, Npad), jnp.float32)
        wt = wt.at[:, :N].set(self.weight.T.astype(jnp.float32))
        self._wt = wt
        b = jnp.zeros((1, Npad), jnp.float32)
        b = b.at[0, :N].set(self.bias.astype(jnp.float32)
                            * jnp.float32(self.bias_gain))
        self._b2d = b

    def __call__(self, x, *, tm=256, compute_dtype=None):
        M, K = x.shape
        assert K == self.in_features
        N = self.out_features
        Npad = self._n_pad
        out_dtype = x.dtype

        # Batch tiling: big tiles fill the MXU; clamp for small batches and
        # zero-pad ragged batches (padded rows are sliced off afterwards).
        tm_eff = min(tm, _round_up(M, 8))
        Mpad = _round_up(M, tm_eff)

        # bf16 operands hit the v6e/v7x MXU fast path; accumulation stays f32.
        cdt = x.dtype if compute_dtype is None else compute_dtype
        xp = x
        if Mpad != M:
            xp = jnp.zeros((Mpad, K), x.dtype).at[:M, :].set(x)
        xp = xp.astype(cdt)
        wt = self._wt.astype(cdt)  # one-time cast (constant-folded under jit)

        kernel = functools.partial(
            _fc_kernel,
            weight_gain=float(self.weight_gain),
            activation=self.activation,
        )

        grid = (Mpad // tm_eff,)

        isz = jnp.dtype(cdt).itemsize
        osz = jnp.dtype(out_dtype).itemsize
        # Double-buffered pipeline footprint; only override the scoped VMEM
        # default when we actually approach it (keeps v5e/v7x defaults intact).
        vmem_needed = 2 * (tm_eff * K * isz + K * Npad * isz
                           + Npad * 4 + tm_eff * Npad * osz)
        compiler_kwargs = dict(dimension_semantics=("parallel",))
        if vmem_needed > 24 * 1024 * 1024:
            compiler_kwargs["vmem_limit_bytes"] = min(
                64 * 1024 * 1024, vmem_needed + (4 << 20))

        cost = pl.CostEstimate(
            flops=2 * Mpad * Npad * K,
            transcendentals=0,
            bytes_accessed=(Mpad * K * isz + K * Npad * isz
                            + Npad * 4 + Mpad * Npad * osz),
        )

        y = pl.pallas_call(
            kernel,
            out_shape=jax.ShapeDtypeStruct((Mpad, Npad), out_dtype),
            grid_spec=pltpu.PrefetchScalarGridSpec(
                num_scalar_prefetch=0,
                grid=grid,
                in_specs=[
                    pl.BlockSpec((tm_eff, K), lambda i: (i, 0)),   # x tile
                    pl.BlockSpec((K, Npad), lambda i: (0, 0)),     # (K,N) weight
                    pl.BlockSpec((1, Npad), lambda i: (0, 0)),     # f32 bias
                ],
                out_specs=pl.BlockSpec((tm_eff, Npad), lambda i: (i, 0)),
            ),
            compiler_params=pltpu.CompilerParams(**compiler_kwargs),
            cost_estimate=cost,
        )(xp, wt, self._b2d)

        return y[:M, :N]


def _reference(x, w, b, weight_gain, bias_gain, activation):
    wg = w.astype(jnp.float32) * weight_gain
    bg = b.astype(jnp.float32) * bias_gain
    y = x.astype(jnp.float32) @ wg.T + bg[None, :]
    if activation == "lrelu":
        y = jnp.where(y >= 0, y, 0.2 * y) * np.sqrt(2.0)
    elif activation == "relu":
        y = jnp.maximum(y, 0.0) * np.sqrt(2.0)
    return y


if __name__ == "__main__":
    key = jax.random.PRNGKey(0)
    kx1, kx2, kp1, kp2 = jax.random.split(key, 4)

    in_features, out_features = 32, 64

    # linear path (addmm equivalent), batch multiple of 8
    x1 = jax.random.normal(kx1, (16, in_features), dtype=jnp.float32)
    fc_lin = FullyConnectedLayerBase(in_features, out_features,
                                     activation="linear", lr_multiplier=1.0)
    fc_lin.init_params(kp1)
    y_lin = jax.block_until_ready(fc_lin(x1))
    ref_lin = _reference(x1, fc_lin.weight, fc_lin.bias,
                         fc_lin.weight_gain, fc_lin.bias_gain, "linear")
    np.testing.assert_allclose(np.asarray(y_lin), np.asarray(ref_lin),
                               rtol=1e-5, atol=1e-5)

    # lrelu path (matmul + bias_act), ragged batch exercises zero-row padding,
    # lr_multiplier != 1 exercises both gains.
    x2 = jax.random.normal(kx2, (10, in_features), dtype=jnp.float32)
    fc_lrelu = FullyConnectedLayerBase(in_features, out_features,
                                       activation="lrelu", lr_multiplier=0.5)
    fc_lrelu.init_params(kp2)
    y_lrelu = jax.block_until_ready(fc_lrelu(x2))
    ref_lrelu = _reference(x2, fc_lrelu.weight, fc_lrelu.bias,
                           fc_lrelu.weight_gain, fc_lrelu.bias_gain, "lrelu")
    np.testing.assert_allclose(np.asarray(y_lrelu), np.asarray(ref_lrelu),
                               rtol=1e-5, atol=1e-5)

    # bf16 MXU fast path (v6e/v7x), f32 accumulation -> loose tolerance check.
    y_bf16 = jax.block_until_ready(fc_lrelu(x2, compute_dtype=jnp.bfloat16))
    np.testing.assert_allclose(np.asarray(y_bf16), np.asarray(ref_lrelu),
                               rtol=5e-2, atol=5e-2)

    print("KERNEL_OK")
</pallas_src>

<mosaic_0001>
module attributes {stable_mosaic.version = 11 : i64} {
  func.func @_fc_kernel(%arg0: i32, %arg1: memref<16x32xf32, #tpu.memory_space<vmem>>, %arg2: memref<32x128xf32, #tpu.memory_space<vmem>>, %arg3: memref<1x128xf32, #tpu.memory_space<vmem>>, %arg4: memref<16x128xf32, #tpu.memory_space<vmem>>) attributes {dimension_semantics = [#tpu.dimension_semantics<parallel>], iteration_bounds = array<i64: 1>, scalar_prefetch = 0 : i64, scratch_operands = 0 : i64, tpu.core_type = #tpu.core_type<tc>, window_params = [{transform_indices = @transform_0, window_bounds = array<i64: 16, 32>}, {pipeline_mode = #tpu.pipeline_mode<synchronous>, transform_indices = @transform_1, window_bounds = array<i64: 32, 128>}, {pipeline_mode = #tpu.pipeline_mode<synchronous>, transform_indices = @transform_2, window_bounds = array<i64: 1, 128>}, {transform_indices = @transform_3, window_bounds = array<i64: 16, 128>}]} {
    %c0 = arith.constant 0 : index
    %c0_0 = arith.constant 0 : index
    %0 = vector.load %arg1[%c0, %c0_0] : memref<16x32xf32, #tpu.memory_space<vmem>>, vector<16x32xf32>
    %c0_1 = arith.constant 0 : index
    %c0_2 = arith.constant 0 : index
    %1 = vector.load %arg2[%c0_1, %c0_2] : memref<32x128xf32, #tpu.memory_space<vmem>>, vector<32x128xf32>
    %cst = arith.constant dense<0.000000e+00> : vector<16x128xf32>
    %2 = tpu.matmul %0, %1, %cst {dimension_numbers = #tpu.dot_dimension_numbers<[1], [0], [0], [1], [0, 0, 1, 1], [], []>} : vector<16x32xf32>, vector<32x128xf32>, vector<16x128xf32> -> vector<16x128xf32>
    %cst_3 = arith.constant 0.176776692 : f32
    %3 = vector.broadcast %cst_3 : f32 to vector<16x128xf32>
    %4 = arith.mulf %2, %3 : vector<16x128xf32>
    %c0_4 = arith.constant 0 : index
    %c0_5 = arith.constant 0 : index
    %5 = vector.load %arg3[%c0_4, %c0_5] : memref<1x128xf32, #tpu.memory_space<vmem>>, vector<1x128xf32>
    %6 = vector.broadcast %5 : vector<1x128xf32> to vector<16x128xf32>
    %7 = arith.addf %4, %6 : vector<16x128xf32>
    %c0_6 = arith.constant 0 : index
    %c0_7 = arith.constant 0 : index
    %8 = vector.load %arg4[%c0_6, %c0_7] : memref<16x128xf32, #tpu.memory_space<vmem>>, vector<16x128xf32>
    tpu.vector_store %arg4[%c0_6, %c0_7], %7 {strides = array<i32>} : memref<16x128xf32, #tpu.memory_space<vmem>>, vector<16x128xf32>,
    return
  }
  func.func @transform_0(%arg0: i32) -> (i32, i32) {
    %c0_i32 = arith.constant 0 : i32
    %c0_i32_0 = arith.constant 0 : i32
    return %arg0, %c0_i32 : i32, i32
  }
  func.func @transform_1(%arg0: i32) -> (i32, i32) {
    %c0_i32 = arith.constant 0 : i32
    %c0_i32_0 = arith.constant 0 : i32
    %c0_i32_1 = arith.constant 0 : i32
    return %c0_i32, %c0_i32_0 : i32, i32
  }
  func.func @transform_2(%arg0: i32) -> (i32, i32) {
    %c0_i32 = arith.constant 0 : i32
    %c0_i32_0 = arith.constant 0 : i32
    %c0_i32_1 = arith.constant 0 : i32
    return %c0_i32, %c0_i32_0 : i32, i32
  }
  func.func @transform_3(%arg0: i32) -> (i32, i32) {
    %c0_i32 = arith.constant 0 : i32
    %c0_i32_0 = arith.constant 0 : i32
    return %arg0, %c0_i32 : i32, i32
  }
}

</mosaic_0001>

<llo_original>
// kernel: tpu_custom_call.1
$region0: #{tpu_custom_call.1}
  #allocation0 [shape = 'u32[]', space=smem, size = 0x4, offset = 0x4, fixed_abs, tag = 'smem constant byte address 0x4 - core index']
  #allocation1 [shape = 'u32[144,128]{1,0:T(1,128)}', space=vmem, size = 0x12000, scoped, tag = 'internal scratch']
  %s0 = inlined_call_operand.hbm [shape: f32[16,32], index: 0, kind: input, shape index: {}]
  %s1 = inlined_call_operand.hbm [shape: f32[32,128], index: 1, kind: input, shape index: {}]
  %s2 = inlined_call_operand.vmem [shape: f32[1,128], index: 2, kind: input, shape index: {}]
  %s3 = inlined_call_operand.hbm [shape: f32[16,128], index: 3, kind: output, shape index: {}]
  %s4 = sld [smem:[#allocation0]]
  $region30: #{tpu_custom_call.1} parent=0
    _
  %s6 = ssub.s32 1, %s4
  %s7 = scalar_select 0, %s6, %s4
  $region1: #{tpu_custom_call.1} parent=0
    #allocation2 [shape = 'u8[8192]{0}', space=vmem, size = 0x2000, scoped, tag = 'input window, operand 0, single buffered']
    #allocation3 [shape = 's32[1]{0}', space=sflag, size = 0x4, scoped, tag = 'scoped memory for tpu_custom_call.1']
    #allocation4 [shape = 's32[1]{0}', space=sflag, size = 0x4, scoped, tag = 'scoped memory for tpu_custom_call.1']
    #allocation5 [shape = 'u8[16384]{0}', space=vmem, size = 0x4000, scoped, tag = 'input window, operand 1, single buffered']
    #allocation6 [shape = 's32[1]{0}', space=sflag, size = 0x4, scoped, tag = 'scoped memory for tpu_custom_call.1']
    #allocation7 [shape = 'u8[8192]{0}', space=vmem, size = 0x2000, scoped, tag = 'output window, operand 0, single buffered']
    %8 = vsyncpa [#allocation3], 0
    %9 = vsyncpa [#allocation6], 0
    %10 = vsyncpa [#allocation4], 0
    // Predicated region
    $region2: #{tpu_custom_call.1} parent=1 // pred_check
      _
    $region3: #{tpu_custom_call.1} parent=1 // pred_check_branch
      %12 = sbr.rel (0) target = $region5
    $region4: #{tpu_custom_call.1} parent=1 // pred_region
      %s14 = ssub.s32 256, 256
      %15 = vsyncadd [#allocation3], %s14
      %s16 = sshll.u32 [#allocation2], 4
      %s17 = int_to_ptr.vmem [resolvable:$true] %s16
      %22 = dma.hbm_to_vmem [thread:$0]  %s0, 256, %s17, [#allocation3], 128, 128, 8
    $region5: #{tpu_custom_call.1} parent=1 // pred_fallthru
      _
    // Predicated region
    $region6: #{tpu_custom_call.1} parent=1 // pred_check
      _
    $region7: #{tpu_custom_call.1} parent=1 // pred_check_branch
      %24 = sbr.rel (0) target = $region9
    $region8: #{tpu_custom_call.1} parent=1 // pred_region
      %s26 = ssub.s32 512, 512
      %27 = vsyncadd [#allocation6], %s26
      %s28 = sshll.u32 [#allocation5], 4
      %s29 = int_to_ptr.vmem [resolvable:$true] %s28
      %34 = dma.hbm_to_vmem [thread:$0]  %s1, 512, %s29, [#allocation6], 128, 128, 8
    $region9: #{tpu_custom_call.1} parent=1 // pred_fallthru
      _
    // Predicated region
    $region10: #{tpu_custom_call.1} parent=1 // pred_check
      _
    $region11: #{tpu_custom_call.1} parent=1 // pred_check_branch
      %36 = sbr.rel (0) target = $region13
    $region12: #{tpu_custom_call.1} parent=1 // pred_region
      _
    $region13: #{tpu_custom_call.1} parent=1 // pred_fallthru
      _
    // Predicated region
    $region14: #{tpu_custom_call.1} parent=1 // pred_check
      _
    $region15: #{tpu_custom_call.1} parent=1 // pred_check_branch
      %38 = sbr.rel (0) target = $region17
    $region16: #{tpu_custom_call.1} parent=1 // pred_region
      %39 = dma.done [#allocation3], 256
    $region17: #{tpu_custom_call.1} parent=1 // pred_fallthru
      _
    // Predicated region
    $region18: #{tpu_custom_call.1} parent=1 // pred_check
      _
    $region19: #{tpu_custom_call.1} parent=1 // pred_check_branch
      %41 = sbr.rel (0) target = $region21
    $region20: #{tpu_custom_call.1} parent=1 // pred_region
      %42 = dma.done [#allocation6], 512
    $region21: #{tpu_custom_call.1} parent=1 // pred_fallthru
      _
    %v43 = vld [vmem:[#allocation2] sm:$0xff]
    %v44 = vld [vmem:[#allocation2 + $0x8] sm:$0xff]
    %v45 = vld [vmem:[#allocation5] sm:$0xff]
    %v46 = vld [vmem:[#allocation5 + $0x8] sm:$0xff]
    %v47 = vld [vmem:[#allocation5 + $0x10] sm:$0xff]
    %v48 = vld [vmem:[#allocation5 + $0x18] sm:$0xff]
    %vm49 = vcmask 261120
    %v51 = vsel %vm49, %v43, 0
    %v54 = vsel %vm49, %v44, 0
    %56 = vmatprep.subr.mxu0 0.0
    %57 = vmatpush1.msra.mxu0 0.0
    %58 = vmatprep.subr.mxu0 0.0
    %59 = vmatpush1.msra.mxu0 0.0
    %60 = vmatprep.subr.mxu0 0.0
    %61 = vmatpush1.msra.mxu0 0.0
    %62 = vmatprep.subr.mxu0 0.0
    %63 = vmatpush1.msra.mxu0 0.0
    %64 = vmatprep.subr.mxu0 0.0
    %65 = vmatpush1.msra.mxu0 0.0
    %66 = vmatprep.subr.mxu0 0.0
    %67 = vmatpush1.msra.mxu0 0.0
    %68 = vmatprep.subr.mxu0 0.0
    %69 = vmatpush1.msra.mxu0 0.0
    %70 = vmatprep.subr.mxu0 0.0
    %71 = vmatpush1.msra.mxu0 0.0
    %72 = vmatprep.subr.mxu0 0.0
    %73 = vmatpush1.msra.mxu0 0.0
    %74 = vmatprep.subr.mxu0 0.0
    %75 = vmatpush1.msra.mxu0 0.0
    %76 = vmatprep.subr.mxu0 0.0
    %77 = vmatpush1.msra.mxu0 0.0
    %78 = vmatprep.subr.mxu0 0.0
    %79 = vmatpush1.msra.mxu0 0.0
    %80 = vmatprep.subr.mxu0 0.0
    %81 = vmatpush1.msra.mxu0 %v48
    %82 = vmatprep.subr.mxu0 0.0
    %83 = vmatpush1.msra.mxu0 %v47
    %84 = vmatprep.subr.mxu0 0.0
    %85 = vmatpush1.msra.mxu0 %v46
    %86 = vmatprep.subr.mxu0 0.0
    %87 = vmatpush1.msra.mxu0 %v45
    %88 = vmatprep.subr.mxu0 0.0
    %89 = vmatpush2.msra.mxu0 0.0
    %90 = vmatprep.subr.mxu0 0.0
    %91 = vmatpush2.msra.mxu0 0.0
    %92 = vmatprep.subr.mxu0 0.0
    %93 = vmatpush2.msra.mxu0 0.0
    %94 = vmatprep.subr.mxu0 0.0
    %95 = vmatpush2.msra.mxu0 0.0
    %96 = vmatprep.subr.mxu0 0.0
    %97 = vmatpush2.msra.mxu0 0.0
    %98 = vmatprep.subr.mxu0 0.0
    %99 = vmatpush2.msra.mxu0 0.0
    %100 = vmatprep.subr.mxu0 0.0
    %101 = vmatpush2.msra.mxu0 0.0
    %102 = vmatprep.subr.mxu0 0.0
    %103 = vmatpush2.msra.mxu0 0.0
    %104 = vmatprep.subr.mxu0 0.0
    %105 = vmatpush2.msra.mxu0 0.0
    %106 = vmatprep.subr.mxu0 0.0
    %107 = vmatpush2.msra.mxu0 0.0
    %108 = vmatprep.subr.mxu0 0.0
    %109 = vmatpush2.msra.mxu0 0.0
    %110 = vmatprep.subr.mxu0 0.0
    %111 = vmatpush2.msra.mxu0 0.0
    %112 = vmatprep.subr.mxu0 0.0
    %113 = vmatpush2.msra.mxu0 0.0
    %114 = vmatprep.subr.mxu0 0.0
    %115 = vmatpush2.msra.mxu0 0.0
    %116 = vmatprep.subr.mxu0 0.0
    %117 = vmatpush2.msra.mxu0 0.0
    %118 = vmatprep.subr.mxu0 0.0
    %119 = vmatpush2.msra.mxu0 0.0
    %120 = vmatprep.mubr.f32.mxu0 0.0
    %121 = vmatmul.mubr.f32.gmra.mxu0 %v51
    %v122 = vpop.f32.mrf.mxu0
    %v123 = vadd.f32 0.0, %v122
    %v124 = vpop.f32.mrf.mxu0
    %125 = vmatprep.mubr.f32.mxu0 0.0
    %126 = vmatmul.mubr.f32.gmra.mxu0 %v54
    %v127 = vpop.f32.mrf.mxu0
    %v128 = vadd.f32 0.0, %v127
    %v129 = vpop.f32.mrf.mxu0
    %130 = vdwg.mxu0
    %v131 = vmul.f32 %v123, 0.17677669
    %v132 = vmul.f32 %v128, 0.17677669
    %v133 = vld [vmem:[%s2] sm:$0x1]
    %v135 = vlaneseq
    %v136 = vshrl.u32 %v135, 7
    %v137 = vsub.s32 0, %v136
    %v138 = vrot.slane %v133, %v137
    %v140 = vadd.f32 %v131, %v138
    %v141 = vadd.f32 %v132, %v138
    %142 = vst [vmem:[#allocation7] sm:$0xff] %v140
    %143 = vst [vmem:[#allocation7 + $0x8] sm:$0xff] %v141
    // Predicated region
    $region22: #{tpu_custom_call.1} parent=1 // pred_check
      _
    $region23: #{tpu_custom_call.1} parent=1 // pred_check_branch
      %145 = sbr.rel (0) target = $region25
    $region24: #{tpu_custom_call.1} parent=1 // pred_region
      %s147 = ssub.s32 256, 256
      %148 = vsyncadd [#allocation4], %s147
      %s149 = sshll.u32 [#allocation7], 4
      %s150 = int_to_ptr.vmem [resolvable:$true] %s149
      %155 = dma.vmem_to_hbm [thread:$0]  %s150, 256, %s3, [#allocation4], 128, 128, 8
    $region25: #{tpu_custom_call.1} parent=1 // pred_fallthru
      _
    // Predicated region
    $region26: #{tpu_custom_call.1} parent=1 // pred_check
      _
    $region27: #{tpu_custom_call.1} parent=1 // pred_check_branch
      %157 = sbr.rel (0) target = $region29
    $region28: #{tpu_custom_call.1} parent=1 // pred_region
      %158 = dma.done [#allocation4], 256
    $region29: #{tpu_custom_call.1} parent=1 // pred_fallthru
      _
    %159 = vsyncpa [#allocation3], 1
    %160 = vsyncpa [#allocation6], 1
    %161 = vsyncpa [#allocation4], 1

</llo_original>
